<compile_context>
chip_gen: v5e
topology: v5e:2x2
jax: 0.10.0
libtpu: 0.0.40
codegen_flags: <defaults>
</compile_context>

<pallas_src>
import jax
import jax.numpy as jnp
from jax.experimental import pallas as pl
from jax.experimental.pallas import tpu as pltpu


def _round_up(n, m):
    return (n + m - 1) // m * m


def _pad_dim(n):
    # v6e/v7x MXUs are 256 wide: align already-large dims to 256; keep small
    # dims at 128 (over-padding tiny dims just multiplies zero work).
    return _round_up(n, 256) if n >= 256 else _round_up(n, 128)


def _choose_tb(batch):
    bp = _round_up(max(batch, 1), 128)
    if bp >= 256:
        # At least 2 grid steps (v7x has 2 TCs; "parallel" shards grid steps),
        # capped at 256 rows (v6e/v7x MXU M width; also fine on v5e).
        return min(256, max(128, (bp // 2) // 128 * 128))
    return 128


def nbeats_kernel(x_ref, w1_ref, w23_ref, w4t_ref, b_ref, o_ref):
    x = x_ref[...]                                            # (TB, Dp) bf16
    # fc1 + relu      (dropout1 = identity at inference)
    h = jnp.dot(x, w1_ref[...], preferred_element_type=jnp.float32)
    h = jnp.maximum(h + b_ref[0:1, :], 0.0).astype(jnp.bfloat16)
    # fc2 + relu      (dropout2 = identity)
    h = jnp.dot(h, w23_ref[0], preferred_element_type=jnp.float32)
    h = jnp.maximum(h + b_ref[1:2, :], 0.0).astype(jnp.bfloat16)
    # fc3 + relu      (dropout3 = identity)
    h = jnp.dot(h, w23_ref[1], preferred_element_type=jnp.float32)
    h = jnp.maximum(h + b_ref[2:3, :], 0.0).astype(jnp.bfloat16)
    # fc4 head: contract hidden dim of h (TB,Hp) against the row-padded fc4
    # weight slab (8,Hp) -> (8,TB); row 0 is the real forecast, lane-dense.
    out = jax.lax.dot_general(w4t_ref[...], h, (((1,), (1,)), ((), ())),
                              preferred_element_type=jnp.float32)
    # Full 8-row store: unmasked vst, no sublane extract (row 0 read by host).
    o_ref[...] = (out + b_ref[3:4, 0:1]).astype(o_ref.dtype)


def prepare_params(params, *, weight_dtype=jnp.bfloat16):
    """One-time padding/packing of the NBeats weights. Call once, reuse."""
    w1, b1, w2, b2, w3, b3, w4, b4 = params              # weights are (in, out)
    D, H = w1.shape
    Dp, Hp = _pad_dim(D), _pad_dim(H)

    w1p = jnp.zeros((Dp, Hp), weight_dtype).at[:D, :H].set(w1.astype(weight_dtype))
    w2p = jnp.zeros((Hp, Hp), weight_dtype).at[:H, :H].set(w2.astype(weight_dtype))
    w3p = jnp.zeros((Hp, Hp), weight_dtype).at[:H, :H].set(w3.astype(weight_dtype))
    w23 = jnp.stack([w2p, w3p])                           # (2, Hp, Hp)
    # fc4 weight as an (8, Hp) row slab (row 0 = real weights, rest zero).
    w4t = jnp.zeros((8, Hp), weight_dtype).at[0, :H].set(w4[:, 0].astype(weight_dtype))
    # Bias slab (f32): rows 0..2 = b1..b3; padded lanes stay exactly zero so
    # zero-padded hidden lanes remain 0 through every relu. [3,0] = b4.
    bias = jnp.zeros((4, Hp), jnp.float32)
    bias = bias.at[0, :H].set(b1.reshape(-1))
    bias = bias.at[1, :H].set(b2.reshape(-1))
    bias = bias.at[2, :H].set(b3.reshape(-1))
    bias = bias.at[3, 0].set(b4.reshape(-1)[0])

    return {"w1p": w1p, "w23": w23, "w4t": w4t, "bias": bias,
            "D": D, "Dp": Dp, "Hp": Hp}


def nbeats_forward(x, packed, *, tb=None):
    """x: (B, ...) flattened to (B, D_in). packed: prepare_params() result.

    Returns the forecast (B, 1) float32.
    """
    B = x.shape[0]
    x2d = x.reshape(B, -1)
    D, Dp, Hp = packed["D"], packed["Dp"], packed["Hp"]
    assert x2d.shape[1] == D, "input feature size mismatch with packed params"

    if tb is None:
        tb = _choose_tb(B)
    Bp = _round_up(B, tb)

    xb = x2d.astype(jnp.bfloat16)
    if (Bp, Dp) != (B, D):
        xp = jnp.zeros((Bp, Dp), jnp.bfloat16).at[:B, :D].set(xb)
    else:
        xp = xb                                            # no padding needed

    def _call(single_buffer_weights):
        def wspec(shape, imap):
            if single_buffer_weights:
                return pl.BlockSpec(shape, imap, pipeline_mode=pl.Buffered(1))
            return pl.BlockSpec(shape, imap)

        return pl.pallas_call(
            nbeats_kernel,
            out_shape=jax.ShapeDtypeStruct((8, Bp), jnp.float32),
            grid=(Bp // tb,),
            in_specs=[
                pl.BlockSpec((tb, Dp), lambda i: (i, 0)),       # x batch tile
                wspec((Dp, Hp), lambda i: (0, 0)),              # w1 (resident)
                wspec((2, Hp, Hp), lambda i: (0, 0, 0)),        # w2/w3 (resident)
                wspec((8, Hp), lambda i: (0, 0)),               # fc4 rows (resident)
                wspec((4, Hp), lambda i: (0, 0)),               # bias slab (resident)
            ],
            out_specs=pl.BlockSpec((8, tb), lambda i: (0, i)),  # lane-dense output
            compiler_params=pltpu.CompilerParams(
                dimension_semantics=("parallel",)),
        )(xp, packed["w1p"], packed["w23"], packed["w4t"], packed["bias"])

    try:
        out = _call(True)
    except Exception:
        # Fallback if this Pallas build rejects single-buffered inputs.
        out = _call(False)

    return out[0, :B].reshape(B, 1)


def init_params(key, input_size, hidden_dim):
    """Mimics nn.Linear's U(-1/sqrt(fan_in), 1/sqrt(fan_in)); weights (in, out)."""
    def linear(k, fan_in, fan_out):
        kw, kb = jax.random.split(k)
        bound = 1.0 / jnp.sqrt(jnp.float32(fan_in))
        w = jax.random.uniform(kw, (fan_in, fan_out), jnp.float32, -bound, bound)
        b = jax.random.uniform(kb, (1, fan_out), jnp.float32, -bound, bound)
        return w, b

    k1, k2, k3, k4 = jax.random.split(key, 4)
    w1, b1 = linear(k1, input_size, hidden_dim)
    w2, b2 = linear(k2, hidden_dim, hidden_dim)
    w3, b3 = linear(k3, hidden_dim, hidden_dim)
    w4, b4 = linear(k4, hidden_dim, 1)
    return (w1, b1, w2, b2, w3, b3, w4, b4)


if __name__ == "__main__":
    key = jax.random.PRNGKey(0)

    # Small shapes: batch=8, window of 8 timesteps x 4 features -> D_in=32.
    B, SEQ, FEAT = 8, 8, 4
    INPUT_SIZE = SEQ * FEAT
    HIDDEN = 32

    kx, kp = jax.random.split(key)
    x = jax.random.normal(kx, (B, SEQ, FEAT), jnp.float32)
    params = init_params(kp, INPUT_SIZE, HIDDEN)

    # One-time weight packing, reused by every forward call.
    packed = prepare_params(params)

    forecast = jax.block_until_ready(nbeats_forward(x, packed))

    # Reference: same math in plain JAX (bf16 operands, f32 accumulation,
    # dropout = identity), mirroring the kernel's numerics.
    w1, b1, w2, b2, w3, b3, w4, b4 = params
    bf = jnp.bfloat16
    h = x.reshape(B, -1).astype(bf)
    h = jnp.maximum(jnp.dot(h, w1.astype(bf), preferred_element_type=jnp.float32) + b1, 0.0).astype(bf)
    h = jnp.maximum(jnp.dot(h, w2.astype(bf), preferred_element_type=jnp.float32) + b2, 0.0).astype(bf)
    h = jnp.maximum(jnp.dot(h, w3.astype(bf), preferred_element_type=jnp.float32) + b3, 0.0).astype(bf)
    ref = jnp.dot(h, w4.astype(bf), preferred_element_type=jnp.float32) + b4

    assert forecast.shape == (B, 1)
    assert jnp.allclose(forecast, ref, atol=1e-3, rtol=1e-3)
    print("KERNEL_OK")
</pallas_src>

<mosaic_0001>
module attributes {stable_mosaic.version = 11 : i64} {
  func.func @nbeats_kernel(%arg0: i32, %arg1: memref<128x128xbf16, #tpu.memory_space<vmem>>, %arg2: memref<128x128xbf16, #tpu.memory_space<vmem>>, %arg3: memref<2x128x128xbf16, #tpu.memory_space<vmem>>, %arg4: memref<8x128xbf16, #tpu.memory_space<vmem>>, %arg5: memref<4x128xf32, #tpu.memory_space<vmem>>, %arg6: memref<8x128xf32, #tpu.memory_space<vmem>>) attributes {dimension_semantics = [#tpu.dimension_semantics<parallel>], iteration_bounds = array<i64: 1>, scalar_prefetch = 0 : i64, scratch_operands = 0 : i64, tpu.core_type = #tpu.core_type<tc>, window_params = [{transform_indices = @transform_0, window_bounds = array<i64: 128, 128>}, {pipeline_mode = #tpu.pipeline_mode<synchronous>, transform_indices = @transform_1, window_bounds = array<i64: 128, 128>}, {pipeline_mode = #tpu.pipeline_mode<synchronous>, transform_indices = @transform_2, window_bounds = array<i64: 2, 128, 128>}, {pipeline_mode = #tpu.pipeline_mode<synchronous>, transform_indices = @transform_3, window_bounds = array<i64: 8, 128>}, {pipeline_mode = #tpu.pipeline_mode<synchronous>, transform_indices = @transform_4, window_bounds = array<i64: 4, 128>}, {transform_indices = @transform_5, window_bounds = array<i64: 8, 128>}]} {
    %c0 = arith.constant 0 : index
    %c0_0 = arith.constant 0 : index
    %0 = vector.load %arg1[%c0, %c0_0] : memref<128x128xbf16, #tpu.memory_space<vmem>>, vector<128x128xbf16>
    %c0_1 = arith.constant 0 : index
    %c0_2 = arith.constant 0 : index
    %1 = vector.load %arg2[%c0_1, %c0_2] : memref<128x128xbf16, #tpu.memory_space<vmem>>, vector<128x128xbf16>
    %cst = arith.constant dense<0.000000e+00> : vector<128x128xf32>
    %2 = tpu.matmul %0, %1, %cst {dimension_numbers = #tpu.dot_dimension_numbers<[1], [0], [0], [1], [0, 0, 1, 1], [], []>} : vector<128x128xbf16>, vector<128x128xbf16>, vector<128x128xf32> -> vector<128x128xf32>
    %c0_3 = arith.constant 0 : index
    %c0_4 = arith.constant 0 : index
    %3 = vector.load %arg5[%c0_3, %c0_4] : memref<4x128xf32, #tpu.memory_space<vmem>>, vector<1x128xf32>
    %4 = vector.broadcast %3 : vector<1x128xf32> to vector<128x128xf32>
    %5 = arith.addf %2, %4 : vector<128x128xf32>
    %cst_5 = arith.constant 0.000000e+00 : f32
    %6 = vector.broadcast %cst_5 : f32 to vector<128x128xf32>
    %7 = arith.maximumf %5, %6 : vector<128x128xf32>
    %8 = arith.truncf %7 : vector<128x128xf32> to vector<128x128xbf16>
    %c0_6 = arith.constant 0 : index
    %c0_7 = arith.constant 0 : index
    %c0_8 = arith.constant 0 : index
    %9 = vector.load %arg3[%c0_6, %c0_7, %c0_8] : memref<2x128x128xbf16, #tpu.memory_space<vmem>>, vector<1x128x128xbf16>
    %10 = vector.shape_cast %9 : vector<1x128x128xbf16> to vector<128x128xbf16>
    %cst_9 = arith.constant dense<0.000000e+00> : vector<128x128xf32>
    %11 = tpu.matmul %8, %10, %cst_9 {dimension_numbers = #tpu.dot_dimension_numbers<[1], [0], [0], [1], [0, 0, 1, 1], [], []>} : vector<128x128xbf16>, vector<128x128xbf16>, vector<128x128xf32> -> vector<128x128xf32>
    %c1 = arith.constant 1 : index
    %c0_10 = arith.constant 0 : index
    %12 = vector.load %arg5[%c1, %c0_10] : memref<4x128xf32, #tpu.memory_space<vmem>>, vector<1x128xf32>
    %13 = vector.broadcast %12 : vector<1x128xf32> to vector<128x128xf32>
    %14 = arith.addf %11, %13 : vector<128x128xf32>
    %cst_11 = arith.constant 0.000000e+00 : f32
    %15 = vector.broadcast %cst_11 : f32 to vector<128x128xf32>
    %16 = arith.maximumf %14, %15 : vector<128x128xf32>
    %17 = arith.truncf %16 : vector<128x128xf32> to vector<128x128xbf16>
    %c1_12 = arith.constant 1 : index
    %c0_13 = arith.constant 0 : index
    %c0_14 = arith.constant 0 : index
    %18 = vector.load %arg3[%c1_12, %c0_13, %c0_14] : memref<2x128x128xbf16, #tpu.memory_space<vmem>>, vector<1x128x128xbf16>
    %19 = vector.shape_cast %18 : vector<1x128x128xbf16> to vector<128x128xbf16>
    %cst_15 = arith.constant dense<0.000000e+00> : vector<128x128xf32>
    %20 = tpu.matmul %17, %19, %cst_15 {dimension_numbers = #tpu.dot_dimension_numbers<[1], [0], [0], [1], [0, 0, 1, 1], [], []>} : vector<128x128xbf16>, vector<128x128xbf16>, vector<128x128xf32> -> vector<128x128xf32>
    %c2 = arith.constant 2 : index
    %c0_16 = arith.constant 0 : index
    %21 = vector.load %arg5[%c2, %c0_16] : memref<4x128xf32, #tpu.memory_space<vmem>>, vector<1x128xf32>
    %22 = vector.broadcast %21 : vector<1x128xf32> to vector<128x128xf32>
    %23 = arith.addf %20, %22 : vector<128x128xf32>
    %cst_17 = arith.constant 0.000000e+00 : f32
    %24 = vector.broadcast %cst_17 : f32 to vector<128x128xf32>
    %25 = arith.maximumf %23, %24 : vector<128x128xf32>
    %26 = arith.truncf %25 : vector<128x128xf32> to vector<128x128xbf16>
    %c0_18 = arith.constant 0 : index
    %c0_19 = arith.constant 0 : index
    %27 = vector.load %arg4[%c0_18, %c0_19] : memref<8x128xbf16, #tpu.memory_space<vmem>>, vector<8x128xbf16>
    %cst_20 = arith.constant dense<0.000000e+00> : vector<8x128xf32>
    %28 = tpu.matmul %27, %26, %cst_20 {dimension_numbers = #tpu.dot_dimension_numbers<[1], [1], [0], [0], [0, 0, 1, 0], [], []>} : vector<8x128xbf16>, vector<128x128xbf16>, vector<8x128xf32> -> vector<8x128xf32>
    %c3 = arith.constant 3 : index
    %c0_21 = arith.constant 0 : index
    %29 = vector.load %arg5[%c3, %c0_21] : memref<4x128xf32, #tpu.memory_space<vmem>>, vector<1x1xf32>
    %30 = vector.broadcast %29 : vector<1x1xf32> to vector<8x128xf32>
    %31 = arith.addf %28, %30 : vector<8x128xf32>
    %c0_22 = arith.constant 0 : index
    %c0_23 = arith.constant 0 : index
    %32 = vector.load %arg6[%c0_22, %c0_23] : memref<8x128xf32, #tpu.memory_space<vmem>>, vector<8x128xf32>
    tpu.vector_store %arg6[%c0_22, %c0_23], %31 {strides = array<i32>} : memref<8x128xf32, #tpu.memory_space<vmem>>, vector<8x128xf32>,
    return
  }
  func.func @transform_0(%arg0: i32) -> (i32, i32) {
    %c0_i32 = arith.constant 0 : i32
    %c0_i32_0 = arith.constant 0 : i32
    return %arg0, %c0_i32 : i32, i32
  }
  func.func @transform_1(%arg0: i32) -> (i32, i32) {
    %c0_i32 = arith.constant 0 : i32
    %c0_i32_0 = arith.constant 0 : i32
    %c0_i32_1 = arith.constant 0 : i32
    return %c0_i32, %c0_i32_0 : i32, i32
  }
  func.func @transform_2(%arg0: i32) -> (i32, i32, i32) {
    %c0_i32 = arith.constant 0 : i32
    %c0_i32_0 = arith.constant 0 : i32
    %c0_i32_1 = arith.constant 0 : i32
    %c0_i32_2 = arith.constant 0 : i32
    return %c0_i32, %c0_i32_0, %c0_i32_1 : i32, i32, i32
  }
  func.func @transform_3(%arg0: i32) -> (i32, i32) {
    %c0_i32 = arith.constant 0 : i32
    %c0_i32_0 = arith.constant 0 : i32
    %c0_i32_1 = arith.constant 0 : i32
    return %c0_i32, %c0_i32_0 : i32, i32
  }
  func.func @transform_4(%arg0: i32) -> (i32, i32) {
    %c0_i32 = arith.constant 0 : i32
    %c0_i32_0 = arith.constant 0 : i32
    %c0_i32_1 = arith.constant 0 : i32
    return %c0_i32, %c0_i32_0 : i32, i32
  }
  func.func @transform_5(%arg0: i32) -> (i32, i32) {
    %c0_i32 = arith.constant 0 : i32
    %c0_i32_0 = arith.constant 0 : i32
    return %c0_i32, %arg0 : i32, i32
  }
}

module attributes {stable_mosaic.version = 11 : i64} {
  func.func @nbeats_kernel(%arg0: i32, %arg1: memref<128x128xbf16, #tpu.memory_space<vmem>>, %arg2: memref<128x128xbf16, #tpu.memory_space<vmem>>, %arg3: memref<2x128x128xbf16, #tpu.memory_space<vmem>>, %arg4: memref<8x128xbf16, #tpu.memory_space<vmem>>, %arg5: memref<4x128xf32, #tpu.memory_space<vmem>>, %arg6: memref<8x128xf32, #tpu.memory_space<vmem>>) attributes {dimension_semantics = [#tpu.dimension_semantics<parallel>], iteration_bounds = array<i64: 1>, scalar_prefetch = 0 : i64, scratch_operands = 0 : i64, tpu.core_type = #tpu.core_type<tc>, window_params = [{transform_indices = @transform_0, window_bounds = array<i64: 128, 128>}, {pipeline_mode = #tpu.pipeline_mode<synchronous>, transform_indices = @transform_1, window_bounds = array<i64: 128, 128>}, {pipeline_mode = #tpu.pipeline_mode<synchronous>, transform_indices = @transform_2, window_bounds = array<i64: 2, 128, 128>}, {pipeline_mode = #tpu.pipeline_mode<synchronous>, transform_indices = @transform_3, window_bounds = array<i64: 8, 128>}, {pipeline_mode = #tpu.pipeline_mode<synchronous>, transform_indices = @transform_4, window_bounds = array<i64: 4, 128>}, {transform_indices = @transform_5, window_bounds = array<i64: 8, 128>}]} {
    %c0 = arith.constant 0 : index
    %c0_0 = arith.constant 0 : index
    %0 = vector.load %arg1[%c0, %c0_0] : memref<128x128xbf16, #tpu.memory_space<vmem>>, vector<128x128xbf16>
    %c0_1 = arith.constant 0 : index
    %c0_2 = arith.constant 0 : index
    %1 = vector.load %arg2[%c0_1, %c0_2] : memref<128x128xbf16, #tpu.memory_space<vmem>>, vector<128x128xbf16>
    %cst = arith.constant dense<0.000000e+00> : vector<128x128xf32>
    %2 = tpu.matmul %0, %1, %cst {dimension_numbers = #tpu.dot_dimension_numbers<[1], [0], [0], [1], [0, 0, 1, 1], [], []>} : vector<128x128xbf16>, vector<128x128xbf16>, vector<128x128xf32> -> vector<128x128xf32>
    %c0_3 = arith.constant 0 : index
    %c0_4 = arith.constant 0 : index
    %3 = vector.load %arg5[%c0_3, %c0_4] : memref<4x128xf32, #tpu.memory_space<vmem>>, vector<1x128xf32>
    %4 = vector.broadcast %3 : vector<1x128xf32> to vector<128x128xf32>
    %5 = arith.addf %2, %4 : vector<128x128xf32>
    %cst_5 = arith.constant 0.000000e+00 : f32
    %6 = vector.broadcast %cst_5 : f32 to vector<128x128xf32>
    %7 = arith.maximumf %5, %6 : vector<128x128xf32>
    %8 = arith.truncf %7 : vector<128x128xf32> to vector<128x128xbf16>
    %c0_6 = arith.constant 0 : index
    %c0_7 = arith.constant 0 : index
    %c0_8 = arith.constant 0 : index
    %9 = vector.load %arg3[%c0_6, %c0_7, %c0_8] : memref<2x128x128xbf16, #tpu.memory_space<vmem>>, vector<1x128x128xbf16>
    %10 = vector.shape_cast %9 : vector<1x128x128xbf16> to vector<128x128xbf16>
    %cst_9 = arith.constant dense<0.000000e+00> : vector<128x128xf32>
    %11 = tpu.matmul %8, %10, %cst_9 {dimension_numbers = #tpu.dot_dimension_numbers<[1], [0], [0], [1], [0, 0, 1, 1], [], []>} : vector<128x128xbf16>, vector<128x128xbf16>, vector<128x128xf32> -> vector<128x128xf32>
    %c1 = arith.constant 1 : index
    %c0_10 = arith.constant 0 : index
    %12 = vector.load %arg5[%c1, %c0_10] : memref<4x128xf32, #tpu.memory_space<vmem>>, vector<1x128xf32>
    %13 = vector.broadcast %12 : vector<1x128xf32> to vector<128x128xf32>
    %14 = arith.addf %11, %13 : vector<128x128xf32>
    %cst_11 = arith.constant 0.000000e+00 : f32
    %15 = vector.broadcast %cst_11 : f32 to vector<128x128xf32>
    %16 = arith.maximumf %14, %15 : vector<128x128xf32>
    %17 = arith.truncf %16 : vector<128x128xf32> to vector<128x128xbf16>
    %c1_12 = arith.constant 1 : index
    %c0_13 = arith.constant 0 : index
    %c0_14 = arith.constant 0 : index
    %18 = vector.load %arg3[%c1_12, %c0_13, %c0_14] : memref<2x128x128xbf16, #tpu.memory_space<vmem>>, vector<1x128x128xbf16>
    %19 = vector.shape_cast %18 : vector<1x128x128xbf16> to vector<128x128xbf16>
    %cst_15 = arith.constant dense<0.000000e+00> : vector<128x128xf32>
    %20 = tpu.matmul %17, %19, %cst_15 {dimension_numbers = #tpu.dot_dimension_numbers<[1], [0], [0], [1], [0, 0, 1, 1], [], []>} : vector<128x128xbf16>, vector<128x128xbf16>, vector<128x128xf32> -> vector<128x128xf32>
    %c2 = arith.constant 2 : index
    %c0_16 = arith.constant 0 : index
    %21 = vector.load %arg5[%c2, %c0_16] : memref<4x128xf32, #tpu.memory_space<vmem>>, vector<1x128xf32>
    %22 = vector.broadcast %21 : vector<1x128xf32> to vector<128x128xf32>
    %23 = arith.addf %20, %22 : vector<128x128xf32>
    %cst_17 = arith.constant 0.000000e+00 : f32
    %24 = vector.broadcast %cst_17 : f32 to vector<128x128xf32>
    %25 = arith.maximumf %23, %24 : vector<128x128xf32>
    %26 = arith.truncf %25 : vector<128x128xf32> to vector<128x128xbf16>
    %c0_18 = arith.constant 0 : index
    %c0_19 = arith.constant 0 : index
    %27 = vector.load %arg4[%c0_18, %c0_19] : memref<8x128xbf16, #tpu.memory_space<vmem>>, vector<8x128xbf16>
    %cst_20 = arith.constant dense<0.000000e+00> : vector<8x128xf32>
    %28 = tpu.matmul %27, %26, %cst_20 {dimension_numbers = #tpu.dot_dimension_numbers<[1], [1], [0], [0], [0, 0, 1, 0], [], []>} : vector<8x128xbf16>, vector<128x128xbf16>, vector<8x128xf32> -> vector<8x128xf32>
    %c3 = arith.constant 3 : index
    %c0_21 = arith.constant 0 : index
    %29 = vector.load %arg5[%c3, %c0_21] : memref<4x128xf32, #tpu.memory_space<vmem>>, vector<1x1xf32>
    %30 = vector.broadcast %29 : vector<1x1xf32> to vector<8x128xf32>
    %31 = arith.addf %28, %30 : vector<8x128xf32>
    %c0_22 = arith.constant 0 : index
    %c0_23 = arith.constant 0 : index
    %32 = vector.load %arg6[%c0_22, %c0_23] : memref<8x128xf32, #tpu.memory_space<vmem>>, vector<8x128xf32>
    tpu.vector_store %arg6[%c0_22, %c0_23], %31 {strides = array<i32>} : memref<8x128xf32, #tpu.memory_space<vmem>>, vector<8x128xf32>,
    return
  }
  func.func @transform_0(%arg0: i32) -> (i32, i32) {
    %c0_i32 = arith.constant 0 : i32
    %c0_i32_0 = arith.constant 0 : i32
    return %arg0, %c0_i32 : i32, i32
  }
  func.func @transform_1(%arg0: i32) -> (i32, i32) {
    %c0_i32 = arith.constant 0 : i32
    %c0_i32_0 = arith.constant 0 : i32
    %c0_i32_1 = arith.constant 0 : i32
    return %c0_i32, %c0_i32_0 : i32, i32
  }
  func.func @transform_2(%arg0: i32) -> (i32, i32, i32) {
    %c0_i32 = arith.constant 0 : i32
    %c0_i32_0 = arith.constant 0 : i32
    %c0_i32_1 = arith.constant 0 : i32
    %c0_i32_2 = arith.constant 0 : i32
    return %c0_i32, %c0_i32_0, %c0_i32_1 : i32, i32, i32
  }
  func.func @transform_3(%arg0: i32) -> (i32, i32) {
    %c0_i32 = arith.constant 0 : i32
    %c0_i32_0 = arith.constant 0 : i32
    %c0_i32_1 = arith.constant 0 : i32
    return %c0_i32, %c0_i32_0 : i32, i32
  }
  func.func @transform_4(%arg0: i32) -> (i32, i32) {
    %c0_i32 = arith.constant 0 : i32
    %c0_i32_0 = arith.constant 0 : i32
    %c0_i32_1 = arith.constant 0 : i32
    return %c0_i32, %c0_i32_0 : i32, i32
  }
  func.func @transform_5(%arg0: i32) -> (i32, i32) {
    %c0_i32 = arith.constant 0 : i32
    %c0_i32_0 = arith.constant 0 : i32
    return %c0_i32, %arg0 : i32, i32
  }
}

</mosaic_0001>

<llo_original>
// kernel: tpu_custom_call.1
$region0: #{tpu_custom_call.1}
  #allocation0 [shape = 'u32[]', space=smem, size = 0x4, offset = 0x4, fixed_abs, tag = 'smem constant byte address 0x4 - core index']
  #allocation1 [shape = 'u32[72,128]{1,0:T(1,128)}', space=vmem, size = 0x9000, scoped, tag = 'internal scratch']
  %s0 = inlined_call_operand.hbm [shape: bf16[128,128], index: 0, kind: input, shape index: {}]
  %s1 = inlined_call_operand.hbm [shape: bf16[128,128], index: 1, kind: input, shape index: {}]
  %s2 = inlined_call_operand.hbm [shape: bf16[2,128,128], index: 2, kind: input, shape index: {}]
  %s3 = inlined_call_operand.hbm [shape: bf16[8,128], index: 3, kind: input, shape index: {}]
  %s4 = inlined_call_operand.hbm [shape: f32[4,128], index: 4, kind: input, shape index: {}]
  %s5 = inlined_call_operand.hbm [shape: f32[8,128], index: 5, kind: output, shape index: {}]
  %s6 = sld [smem:[#allocation0]]
  $region50: #{tpu_custom_call.1} parent=0
    _
  %s8 = ssub.s32 1, %s6
  %s9 = scalar_select 0, %s8, %s6
  $region1: #{tpu_custom_call.1} parent=0
    #allocation2 [shape = 'u8[32768]{0}', space=vmem, size = 0x8000, scoped, tag = 'input window, operand 0, single buffered']
    #allocation3 [shape = 's32[1]{0}', space=sflag, size = 0x4, scoped, tag = 'scoped memory for tpu_custom_call.1']
    #allocation4 [shape = 's32[1]{0}', space=sflag, size = 0x4, scoped, tag = 'scoped memory for tpu_custom_call.1']
    #allocation5 [shape = 'u8[32768]{0}', space=vmem, size = 0x8000, scoped, tag = 'input window, operand 1, single buffered']
    #allocation6 [shape = 's32[1]{0}', space=sflag, size = 0x4, scoped, tag = 'scoped memory for tpu_custom_call.1']
    #allocation7 [shape = 'u8[65536]{0}', space=vmem, size = 0x10000, scoped, tag = 'input window, operand 2, single buffered']
    #allocation8 [shape = 'u8[2048]{0}', space=vmem, size = 0x800, scoped, tag = 'input window, operand 3, single buffered']
    #allocation9 [shape = 's32[1]{0}', space=sflag, size = 0x4, scoped, tag = 'scoped memory for tpu_custom_call.1']
    #allocation10 [shape = 'u8[2048]{0}', space=vmem, size = 0x800, scoped, tag = 'input window, operand 4, single buffered']
    #allocation11 [shape = 'u8[4096]{0}', space=vmem, size = 0x1000, scoped, tag = 'output window, operand 0, single buffered']
    %10 = vsyncpa [#allocation3], 0
    %11 = vsyncpa [#allocation6], 0
    %12 = vsyncpa [#allocation9], 0
    %13 = vsyncpa [#allocation4], 0
    // Predicated region
    $region2: #{tpu_custom_call.1} parent=1 // pred_check
      _
    $region3: #{tpu_custom_call.1} parent=1 // pred_check_branch
      %15 = sbr.rel (0) target = $region5
    $region4: #{tpu_custom_call.1} parent=1 // pred_region
      %17 = vsyncadd [#allocation3], 0
      %s18 = sshll.u32 %s0, 4
      %s19 = int_to_ptr.hbm [resolvable:$true] %s18
      %s20 = sshll.u32 [#allocation2], 4
      %s21 = int_to_ptr.vmem [resolvable:$true] %s20
      %26 = dma.hbm_to_vmem [thread:$0]  %s19, 1024, %s21, [#allocation3], 64, 64, 4
    $region5: #{tpu_custom_call.1} parent=1 // pred_fallthru
      _
    // Predicated region
    $region6: #{tpu_custom_call.1} parent=1 // pred_check
      _
    $region7: #{tpu_custom_call.1} parent=1 // pred_check_branch
      %28 = sbr.rel (0) target = $region9
    $region8: #{tpu_custom_call.1} parent=1 // pred_region
      %30 = vsyncadd [#allocation6], 0
      %s31 = sshll.u32 %s1, 4
      %s32 = int_to_ptr.hbm [resolvable:$true] %s31
      %s33 = sshll.u32 [#allocation5], 4
      %s34 = int_to_ptr.vmem [resolvable:$true] %s33
      %39 = dma.hbm_to_vmem [thread:$0]  %s32, 1024, %s34, [#allocation6], 64, 64, 4
    $region9: #{tpu_custom_call.1} parent=1 // pred_fallthru
      _
    // Predicated region
    $region10: #{tpu_custom_call.1} parent=1 // pred_check
      _
    $region11: #{tpu_custom_call.1} parent=1 // pred_check_branch
      %41 = sbr.rel (0) target = $region13
    $region12: #{tpu_custom_call.1} parent=1 // pred_region
      %43 = vsyncadd [#allocation6], 0
      %s44 = sshll.u32 %s2, 4
      %s45 = int_to_ptr.hbm [resolvable:$true] %s44
      %s46 = sshll.u32 [#allocation7], 4
      %s47 = int_to_ptr.vmem [resolvable:$true] %s46
      %52 = dma.hbm_to_vmem [thread:$0]  %s45, 2048, %s47, [#allocation6], 64, 64, 4
    $region13: #{tpu_custom_call.1} parent=1 // pred_fallthru
      _
    // Predicated region
    $region14: #{tpu_custom_call.1} parent=1 // pred_check
      _
    $region15: #{tpu_custom_call.1} parent=1 // pred_check_branch
      %54 = sbr.rel (0) target = $region17
    $region16: #{tpu_custom_call.1} parent=1 // pred_region
      %56 = vsyncadd [#allocation9], 0
      %s58 = sshll.u32 %s3, 4
      %s59 = int_to_ptr.hbm [resolvable:$true] %s58
      %s60 = sshll.u32 [#allocation8], 4
      %s61 = int_to_ptr.vmem [resolvable:$true] %s60
      %63 = dma.hbm_to_vmem [thread:$0]  %s59, 64, %s61, [#allocation9]
    $region17: #{tpu_custom_call.1} parent=1 // pred_fallthru
      _
    // Predicated region
    $region18: #{tpu_custom_call.1} parent=1 // pred_check
      _
    $region19: #{tpu_custom_call.1} parent=1 // pred_check_branch
      %65 = sbr.rel (0) target = $region21
    $region20: #{tpu_custom_call.1} parent=1 // pred_region
      %67 = vsyncadd [#allocation9], 0
      %s69 = sshll.u32 %s4, 4
      %s70 = int_to_ptr.hbm [resolvable:$true] %s69
      %s71 = sshll.u32 [#allocation10], 4
      %s72 = int_to_ptr.vmem [resolvable:$true] %s71
      %74 = dma.hbm_to_vmem [thread:$0]  %s70, 64, %s72, [#allocation9]
    $region21: #{tpu_custom_call.1} parent=1 // pred_fallthru
      _
    // Predicated region
    $region22: #{tpu_custom_call.1} parent=1 // pred_check
      _
    $region23: #{tpu_custom_call.1} parent=1 // pred_check_branch
      %76 = sbr.rel (0) target = $region25
    $region24: #{tpu_custom_call.1} parent=1 // pred_region
      %78 = dma.done [#allocation3], 1024
    $region25: #{tpu_custom_call.1} parent=1 // pred_fallthru
      _
    // Predicated region
    $region26: #{tpu_custom_call.1} parent=1 // pred_check
      _
    $region27: #{tpu_custom_call.1} parent=1 // pred_check_branch
      %80 = sbr.rel (0) target = $region29
    $region28: #{tpu_custom_call.1} parent=1 // pred_region
      %82 = dma.done [#allocation6], 1024
    $region29: #{tpu_custom_call.1} parent=1 // pred_fallthru
      _
    // Predicated region
    $region30: #{tpu_custom_call.1} parent=1 // pred_check
      _
    $region31: #{tpu_custom_call.1} parent=1 // pred_check_branch
      %84 = sbr.rel (0) target = $region33
    $region32: #{tpu_custom_call.1} parent=1 // pred_region
      %86 = dma.done [#allocation6], 2048
    $region33: #{tpu_custom_call.1} parent=1 // pred_fallthru
      _
    // Predicated region
    $region34: #{tpu_custom_call.1} parent=1 // pred_check
      _
    $region35: #{tpu_custom_call.1} parent=1 // pred_check_branch
      %88 = sbr.rel (0) target = $region37
    $region36: #{tpu_custom_call.1} parent=1 // pred_region
      %90 = dma.done [#allocation9], 64
    $region37: #{tpu_custom_call.1} parent=1 // pred_fallthru
      _
    // Predicated region
    $region38: #{tpu_custom_call.1} parent=1 // pred_check
      _
    $region39: #{tpu_custom_call.1} parent=1 // pred_check_branch
      %92 = sbr.rel (0) target = $region41
    $region40: #{tpu_custom_call.1} parent=1 // pred_region
      %94 = dma.done [#allocation9], 64
    $region41: #{tpu_custom_call.1} parent=1 // pred_fallthru
      _
    %v95 = vld [vmem:[#allocation2] sm:$0xf]
    %v96 = vld [vmem:[#allocation2 + $0x4] sm:$0xf]
    %v97 = vld [vmem:[#allocation2 + $0x8] sm:$0xf]
    %v98 = vld [vmem:[#allocation2 + $0xc] sm:$0xf]
    %v99 = vld [vmem:[#allocation2 + $0x10] sm:$0xf]
    %v100 = vld [vmem:[#allocation2 + $0x14] sm:$0xf]
    %v101 = vld [vmem:[#allocation2 + $0x18] sm:$0xf]
    %v102 = vld [vmem:[#allocation2 + $0x1c] sm:$0xf]
    %v103 = vld [vmem:[#allocation2 + $0x20] sm:$0xf]
    %v104 = vld [vmem:[#allocation2 + $0x24] sm:$0xf]
    %v105 = vld [vmem:[#allocation2 + $0x28] sm:$0xf]
    %v106 = vld [vmem:[#allocation2 + $0x2c] sm:$0xf]
    %v107 = vld [vmem:[#allocation2 + $0x30] sm:$0xf]
    %v108 = vld [vmem:[#allocation2 + $0x34] sm:$0xf]
    %v109 = vld [vmem:[#allocation2 + $0x38] sm:$0xf]
    %v110 = vld [vmem:[#allocation2 + $0x3c] sm:$0xf]
    %v111 = vld [vmem:[#allocation5] sm:$0xf]
    %v112 = vld [vmem:[#allocation5 + $0x4] sm:$0xf]
    %v113 = vld [vmem:[#allocation5 + $0x8] sm:$0xf]
    %v114 = vld [vmem:[#allocation5 + $0xc] sm:$0xf]
    %v115 = vld [vmem:[#allocation5 + $0x10] sm:$0xf]
    %v116 = vld [vmem:[#allocation5 + $0x14] sm:$0xf]
    %v117 = vld [vmem:[#allocation5 + $0x18] sm:$0xf]
    %v118 = vld [vmem:[#allocation5 + $0x1c] sm:$0xf]
    %v119 = vld [vmem:[#allocation5 + $0x20] sm:$0xf]
    %v120 = vld [vmem:[#allocation5 + $0x24] sm:$0xf]
    %v121 = vld [vmem:[#allocation5 + $0x28] sm:$0xf]
    %v122 = vld [vmem:[#allocation5 + $0x2c] sm:$0xf]
    %v123 = vld [vmem:[#allocation5 + $0x30] sm:$0xf]
    %v124 = vld [vmem:[#allocation5 + $0x34] sm:$0xf]
    %v125 = vld [vmem:[#allocation5 + $0x38] sm:$0xf]
    %v126 = vld [vmem:[#allocation5 + $0x3c] sm:$0xf]
    %v127 = vld [vmem:[#allocation10] sm:$0x1]
    %v128 = vperm.slane %v127, 0
    %v145 = vunpack.c.l.b16 %v95
    %v146 = vunpack.c.l.b16 %v96
    %v147 = vunpack.c.l.b16 %v97
    %v148 = vunpack.c.l.b16 %v98
    %v149 = vunpack.c.l.b16 %v99
    %v150 = vunpack.c.l.b16 %v100
    %v151 = vunpack.c.l.b16 %v101
    %v152 = vunpack.c.l.b16 %v102
    %v153 = vunpack.c.l.b16 %v103
    %v154 = vunpack.c.l.b16 %v104
    %v155 = vunpack.c.l.b16 %v105
    %v156 = vunpack.c.l.b16 %v106
    %v157 = vunpack.c.l.b16 %v107
    %v158 = vunpack.c.l.b16 %v108
    %v159 = vunpack.c.l.b16 %v109
    %v160 = vunpack.c.l.b16 %v110
    %v161 = vpack.c.b16 %v146, %v145
    %v162 = vpack.c.b16 %v148, %v147
    %v163 = vpack.c.b16 %v150, %v149
    %v164 = vpack.c.b16 %v152, %v151
    %v165 = vpack.c.b16 %v154, %v153
    %v166 = vpack.c.b16 %v156, %v155
    %v167 = vpack.c.b16 %v158, %v157
    %v168 = vpack.c.b16 %v160, %v159
    %v193 = vunpack.c.l.b16 %v111
    %v194 = vunpack.c.l.b16 %v112
    %v195 = vunpack.c.l.b16 %v113
    %v196 = vunpack.c.l.b16 %v114
    %v197 = vunpack.c.l.b16 %v115
    %v198 = vunpack.c.l.b16 %v116
    %v199 = vunpack.c.l.b16 %v117
    %v200 = vunpack.c.l.b16 %v118
    %v201 = vunpack.c.l.b16 %v119
    %v202 = vunpack.c.l.b16 %v120
    %v203 = vunpack.c.l.b16 %v121
    %v204 = vunpack.c.l.b16 %v122
    %v205 = vunpack.c.l.b16 %v123
    %v206 = vunpack.c.l.b16 %v124
    %v207 = vunpack.c.l.b16 %v125
    %v208 = vunpack.c.l.b16 %v126
    %v209 = vpack.c.b16 %v194, %v193
    %v210 = vpack.c.b16 %v196, %v195
    %v211 = vpack.c.b16 %v198, %v197
    %v212 = vpack.c.b16 %v200, %v199
    %v213 = vpack.c.b16 %v202, %v201
    %v214 = vpack.c.b16 %v204, %v203
    %v215 = vpack.c.b16 %v206, %v205
    %v216 = vpack.c.b16 %v208, %v207
    %225 = vmatpush.bf16.msra.mxu0 %v216
    %226 = vmatpush.bf16.msra.mxu0 %v215
    %227 = vmatpush.bf16.msra.mxu0 %v214
    %228 = vmatpush.bf16.msra.mxu0 %v213
    %229 = vmatpush.bf16.msra.mxu0 %v212
    %230 = vmatpush.bf16.msra.mxu0 %v211
    %231 = vmatpush.bf16.msra.mxu0 %v210
    %232 = vmatpush.bf16.msra.mxu0 %v209
    %233 = vmatmul.bf16.gmra.mxu0 %v161
    %v234 = vpop.f32.mrf.mxu0
    %v235 = vadd.f32 %v128, %v234
    %v236 = vpop.f32.mrf.mxu0
    %v237 = vadd.f32 %v128, %v236
    %238 = vmatmul.bf16.gmra.mxu0 %v162
    %v239 = vpop.f32.mrf.mxu0
    %v240 = vadd.f32 %v128, %v239
    %v241 = vpop.f32.mrf.mxu0
    %v242 = vadd.f32 %v128, %v241
    %243 = vmatmul.bf16.gmra.mxu0 %v163
    %v244 = vpop.f32.mrf.mxu0
    %v245 = vadd.f32 %v128, %v244
    %v246 = vpop.f32.mrf.mxu0
    %v247 = vadd.f32 %v128, %v246
    %248 = vmatmul.bf16.gmra.mxu0 %v164
    %v249 = vpop.f32.mrf.mxu0
    %v250 = vadd.f32 %v128, %v249
    %v251 = vpop.f32.mrf.mxu0
    %v252 = vadd.f32 %v128, %v251
    %253 = vmatmul.bf16.gmra.mxu0 %v165
    %v254 = vpop.f32.mrf.mxu0
    %v255 = vadd.f32 %v128, %v254
    %v256 = vpop.f32.mrf.mxu0
    %v257 = vadd.f32 %v128, %v256
    %258 = vmatmul.bf16.gmra.mxu0 %v166
    %v259 = vpop.f32.mrf.mxu0
    %v260 = vadd.f32 %v128, %v259
    %v261 = vpop.f32.mrf.mxu0
    %v262 = vadd.f32 %v128, %v261
    %263 = vmatmul.bf16.gmra.mxu0 %v167
    %v264 = vpop.f32.mrf.mxu0
    %v265 = vadd.f32 %v128, %v264
    %v266 = vpop.f32.mrf.mxu0
    %v267 = vadd.f32 %v128, %v266
    %268 = vmatmul.bf16.gmra.mxu0 %v168
    %v269 = vpop.f32.mrf.mxu0
    %v270 = vadd.f32 %v128, %v269
    %v271 = vpop.f32.mrf.mxu0
    %v272 = vadd.f32 %v128, %v271
    %273 = vdwg.mxu0
    %v274 = vmax.f32 %v235, 0.0
    %v275 = vmax.f32 %v237, 0.0
    %v276 = vmax.f32 %v240, 0.0
    %v277 = vmax.f32 %v242, 0.0
    %v278 = vmax.f32 %v245, 0.0
    %v279 = vmax.f32 %v247, 0.0
    %v280 = vmax.f32 %v250, 0.0
    %v281 = vmax.f32 %v252, 0.0
    %v282 = vmax.f32 %v255, 0.0
    %v283 = vmax.f32 %v257, 0.0
    %v284 = vmax.f32 %v260, 0.0
    %v285 = vmax.f32 %v262, 0.0
    %v286 = vmax.f32 %v265, 0.0
    %v287 = vmax.f32 %v267, 0.0
    %v288 = vmax.f32 %v270, 0.0
    %v289 = vmax.f32 %v272, 0.0
    %v290 = vpack.c.bf16 %v275, %v274
    %v291 = vpack.c.bf16 %v277, %v276
    %v292 = vpack.c.bf16 %v279, %v278
    %v293 = vpack.c.bf16 %v281, %v280
    %v294 = vpack.c.bf16 %v283, %v282
    %v295 = vpack.c.bf16 %v285, %v284
    %v296 = vpack.c.bf16 %v287, %v286
    %v297 = vpack.c.bf16 %v289, %v288
    %v298 = vld [vmem:[#allocation7] sm:$0xf]
    %v299 = vld [vmem:[#allocation7 + $0x4] sm:$0xf]
    %v300 = vld [vmem:[#allocation7 + $0x8] sm:$0xf]
    %v301 = vld [vmem:[#allocation7 + $0xc] sm:$0xf]
    %v302 = vld [vmem:[#allocation7 + $0x10] sm:$0xf]
    %v303 = vld [vmem:[#allocation7 + $0x14] sm:$0xf]
    %v304 = vld [vmem:[#allocation7 + $0x18] sm:$0xf]
    %v305 = vld [vmem:[#allocation7 + $0x1c] sm:$0xf]
    %v306 = vld [vmem:[#allocation7 + $0x20] sm:$0xf]
    %v307 = vld [vmem:[#allocation7 + $0x24] sm:$0xf]
    %v308 = vld [vmem:[#allocation7 + $0x28] sm:$0xf]
    %v309 = vld [vmem:[#allocation7 + $0x2c] sm:$0xf]
    %v310 = vld [vmem:[#allocation7 + $0x30] sm:$0xf]
    %v311 = vld [vmem:[#allocation7 + $0x34] sm:$0xf]
    %v312 = vld [vmem:[#allocation7 + $0x38] sm:$0xf]
    %v313 = vld [vmem:[#allocation7 + $0x3c] sm:$0xf]
    %v314 = vld [vmem:[#allocation10 + $0x1] sm:$0x1]
    %v315 = vperm.slane %v314, 0
    %v332 = vunpack.c.l.b16 %v298
    %v333 = vunpack.c.l.b16 %v299
    %v334 = vunpack.c.l.b16 %v300
    %v335 = vunpack.c.l.b16 %v301
    %v336 = vunpack.c.l.b16 %v302
    %v337 = vunpack.c.l.b16 %v303
    %v338 = vunpack.c.l.b16 %v304
    %v339 = vunpack.c.l.b16 %v305
    %v340 = vunpack.c.l.b16 %v306
    %v341 = vunpack.c.l.b16 %v307
    %v342 = vunpack.c.l.b16 %v308
    %v343 = vunpack.c.l.b16 %v309
    %v344 = vunpack.c.l.b16 %v310
    %v345 = vunpack.c.l.b16 %v311
    %v346 = vunpack.c.l.b16 %v312
    %v347 = vunpack.c.l.b16 %v313
    %v348 = vpack.c.b16 %v333, %v332
    %v349 = vpack.c.b16 %v335, %v334
    %v350 = vpack.c.b16 %v337, %v336
    %v351 = vpack.c.b16 %v339, %v338
    %v352 = vpack.c.b16 %v341, %v340
    %v353 = vpack.c.b16 %v343, %v342
    %v354 = vpack.c.b16 %v345, %v344
    %v355 = vpack.c.b16 %v347, %v346
    %364 = vmatpush.bf16.msra.mxu0 %v355
    %365 = vmatpush.bf16.msra.mxu0 %v354
    %366 = vmatpush.bf16.msra.mxu0 %v353
    %367 = vmatpush.bf16.msra.mxu0 %v352
    %368 = vmatpush.bf16.msra.mxu0 %v351
    %369 = vmatpush.bf16.msra.mxu0 %v350
    %370 = vmatpush.bf16.msra.mxu0 %v349
    %371 = vmatpush.bf16.msra.mxu0 %v348
    %372 = vmatmul.bf16.gmra.mxu0 %v290
    %v373 = vpop.f32.mrf.mxu0
    %v374 = vadd.f32 %v315, %v373
    %v375 = vpop.f32.mrf.mxu0
    %v376 = vadd.f32 %v315, %v375
    %377 = vmatmul.bf16.gmra.mxu0 %v291
    %v378 = vpop.f32.mrf.mxu0
    %v379 = vadd.f32 %v315, %v378
    %v380 = vpop.f32.mrf.mxu0
    %v381 = vadd.f32 %v315, %v380
    %382 = vmatmul.bf16.gmra.mxu0 %v292
    %v383 = vpop.f32.mrf.mxu0
    %v384 = vadd.f32 %v315, %v383
    %v385 = vpop.f32.mrf.mxu0
    %v386 = vadd.f32 %v315, %v385
    %387 = vmatmul.bf16.gmra.mxu0 %v293
    %v388 = vpop.f32.mrf.mxu0
    %v389 = vadd.f32 %v315, %v388
    %v390 = vpop.f32.mrf.mxu0
    %v391 = vadd.f32 %v315, %v390
    %392 = vmatmul.bf16.gmra.mxu0 %v294
    %v393 = vpop.f32.mrf.mxu0
    %v394 = vadd.f32 %v315, %v393
    %v395 = vpop.f32.mrf.mxu0
    %v396 = vadd.f32 %v315, %v395
    %397 = vmatmul.bf16.gmra.mxu0 %v295
    %v398 = vpop.f32.mrf.mxu0
    %v399 = vadd.f32 %v315, %v398
    %v400 = vpop.f32.mrf.mxu0
    %v401 = vadd.f32 %v315, %v400
    %402 = vmatmul.bf16.gmra.mxu0 %v296
    %v403 = vpop.f32.mrf.mxu0
    %v404 = vadd.f32 %v315, %v403
    %v405 = vpop.f32.mrf.mxu0
    %v406 = vadd.f32 %v315, %v405
    %407 = vmatmul.bf16.gmra.mxu0 %v297
    %v408 = vpop.f32.mrf.mxu0
    %v409 = vadd.f32 %v315, %v408
    %v410 = vpop.f32.mrf.mxu0
    %v411 = vadd.f32 %v315, %v410
    %412 = vdwg.mxu0
    %v413 = vmax.f32 %v374, 0.0
    %v414 = vmax.f32 %v376, 0.0
    %v415 = vmax.f32 %v379, 0.0
    %v416 = vmax.f32 %v381, 0.0
    %v417 = vmax.f32 %v384, 0.0
    %v418 = vmax.f32 %v386, 0.0
    %v419 = vmax.f32 %v389, 0.0
    %v420 = vmax.f32 %v391, 0.0
    %v421 = vmax.f32 %v394, 0.0
    %v422 = vmax.f32 %v396, 0.0
    %v423 = vmax.f32 %v399, 0.0
    %v424 = vmax.f32 %v401, 0.0
    %v425 = vmax.f32 %v404, 0.0
    %v426 = vmax.f32 %v406, 0.0
    %v427 = vmax.f32 %v409, 0.0
    %v428 = vmax.f32 %v411, 0.0
    %v429 = vpack.c.bf16 %v414, %v413
    %v430 = vpack.c.bf16 %v416, %v415
    %v431 = vpack.c.bf16 %v418, %v417
    %v432 = vpack.c.bf16 %v420, %v419
    %v433 = vpack.c.bf16 %v422, %v421
    %v434 = vpack.c.bf16 %v424, %v423
    %v435 = vpack.c.bf16 %v426, %v425
    %v436 = vpack.c.bf16 %v428, %v427
    %s437 = scalar_lea.vmem [#allocation7], 64
    %v438 = vld [vmem:[%s437] sm:$0xf]
    %v439 = vld [vmem:[%s437 + $0x4] sm:$0xf]
    %v440 = vld [vmem:[%s437 + $0x8] sm:$0xf]
    %v441 = vld [vmem:[%s437 + $0xc] sm:$0xf]
    %v442 = vld [vmem:[%s437 + $0x10] sm:$0xf]
    %v443 = vld [vmem:[%s437 + $0x14] sm:$0xf]
    %v444 = vld [vmem:[%s437 + $0x18] sm:$0xf]
    %v445 = vld [vmem:[%s437 + $0x1c] sm:$0xf]
    %v446 = vld [vmem:[%s437 + $0x20] sm:$0xf]
    %v447 = vld [vmem:[%s437 + $0x24] sm:$0xf]
    %v448 = vld [vmem:[%s437 + $0x28] sm:$0xf]
    %v449 = vld [vmem:[%s437 + $0x2c] sm:$0xf]
    %v450 = vld [vmem:[%s437 + $0x30] sm:$0xf]
    %v451 = vld [vmem:[%s437 + $0x34] sm:$0xf]
    %v452 = vld [vmem:[%s437 + $0x38] sm:$0xf]
    %v453 = vld [vmem:[%s437 + $0x3c] sm:$0xf]
    %v454 = vld [vmem:[#allocation10 + $0x2] sm:$0x1]
    %v455 = vperm.slane %v454, 0
    %v472 = vunpack.c.l.b16 %v438
    %v473 = vunpack.c.l.b16 %v439
    %v474 = vunpack.c.l.b16 %v440
    %v475 = vunpack.c.l.b16 %v441
    %v476 = vunpack.c.l.b16 %v442
    %v477 = vunpack.c.l.b16 %v443
    %v478 = vunpack.c.l.b16 %v444
    %v479 = vunpack.c.l.b16 %v445
    %v480 = vunpack.c.l.b16 %v446
    %v481 = vunpack.c.l.b16 %v447
    %v482 = vunpack.c.l.b16 %v448
    %v483 = vunpack.c.l.b16 %v449
    %v484 = vunpack.c.l.b16 %v450
    %v485 = vunpack.c.l.b16 %v451
    %v486 = vunpack.c.l.b16 %v452
    %v487 = vunpack.c.l.b16 %v453
    %v488 = vpack.c.b16 %v473, %v472
    %v489 = vpack.c.b16 %v475, %v474
    %v490 = vpack.c.b16 %v477, %v476
    %v491 = vpack.c.b16 %v479, %v478
    %v492 = vpack.c.b16 %v481, %v480
    %v493 = vpack.c.b16 %v483, %v482
    %v494 = vpack.c.b16 %v485, %v484
    %v495 = vpack.c.b16 %v487, %v486
    %504 = vmatpush.bf16.msra.mxu0 %v495
    %505 = vmatpush.bf16.msra.mxu0 %v494
    %506 = vmatpush.bf16.msra.mxu0 %v493
    %507 = vmatpush.bf16.msra.mxu0 %v492
    %508 = vmatpush.bf16.msra.mxu0 %v491
    %509 = vmatpush.bf16.msra.mxu0 %v490
    %510 = vmatpush.bf16.msra.mxu0 %v489
    %511 = vmatpush.bf16.msra.mxu0 %v488
    %512 = vmatmul.bf16.gmra.mxu0 %v429
    %v513 = vpop.f32.mrf.mxu0
    %v514 = vadd.f32 %v455, %v513
    %v515 = vpop.f32.mrf.mxu0
    %v516 = vadd.f32 %v455, %v515
    %517 = vmatmul.bf16.gmra.mxu0 %v430
    %v518 = vpop.f32.mrf.mxu0
    %v519 = vadd.f32 %v455, %v518
    %v520 = vpop.f32.mrf.mxu0
    %v521 = vadd.f32 %v455, %v520
    %522 = vmatmul.bf16.gmra.mxu0 %v431
    %v523 = vpop.f32.mrf.mxu0
    %v524 = vadd.f32 %v455, %v523
    %v525 = vpop.f32.mrf.mxu0
    %v526 = vadd.f32 %v455, %v525
    %527 = vmatmul.bf16.gmra.mxu0 %v432
    %v528 = vpop.f32.mrf.mxu0
    %v529 = vadd.f32 %v455, %v528
    %v530 = vpop.f32.mrf.mxu0
    %v531 = vadd.f32 %v455, %v530
    %532 = vmatmul.bf16.gmra.mxu0 %v433
    %v533 = vpop.f32.mrf.mxu0
    %v534 = vadd.f32 %v455, %v533
    %v535 = vpop.f32.mrf.mxu0
    %v536 = vadd.f32 %v455, %v535
    %537 = vmatmul.bf16.gmra.mxu0 %v434
    %v538 = vpop.f32.mrf.mxu0
    %v539 = vadd.f32 %v455, %v538
    %v540 = vpop.f32.mrf.mxu0
    %v541 = vadd.f32 %v455, %v540
    %542 = vmatmul.bf16.gmra.mxu0 %v435
    %v543 = vpop.f32.mrf.mxu0
    %v544 = vadd.f32 %v455, %v543
    %v545 = vpop.f32.mrf.mxu0
    %v546 = vadd.f32 %v455, %v545
    %547 = vmatmul.bf16.gmra.mxu0 %v436
    %v548 = vpop.f32.mrf.mxu0
    %v549 = vadd.f32 %v455, %v548
    %v550 = vpop.f32.mrf.mxu0
    %v551 = vadd.f32 %v455, %v550
    %552 = vdwg.mxu0
    %v553 = vmax.f32 %v514, 0.0
    %v554 = vmax.f32 %v516, 0.0
    %v555 = vmax.f32 %v519, 0.0
    %v556 = vmax.f32 %v521, 0.0
    %v557 = vmax.f32 %v524, 0.0
    %v558 = vmax.f32 %v526, 0.0
    %v559 = vmax.f32 %v529, 0.0
    %v560 = vmax.f32 %v531, 0.0
    %v561 = vmax.f32 %v534, 0.0
    %v562 = vmax.f32 %v536, 0.0
    %v563 = vmax.f32 %v539, 0.0
    %v564 = vmax.f32 %v541, 0.0
    %v565 = vmax.f32 %v544, 0.0
    %v566 = vmax.f32 %v546, 0.0
    %v567 = vmax.f32 %v549, 0.0
    %v568 = vmax.f32 %v551, 0.0
    %v569 = vpack.c.bf16 %v554, %v553
    %v570 = vpack.c.bf16 %v556, %v555
    %v571 = vpack.c.bf16 %v558, %v557
    %v572 = vpack.c.bf16 %v560, %v559
    %v573 = vpack.c.bf16 %v562, %v561
    %v574 = vpack.c.bf16 %v564, %v563
    %v575 = vpack.c.bf16 %v566, %v565
    %v576 = vpack.c.bf16 %v568, %v567
    %v577 = vld [vmem:[#allocation8] sm:$0xf]
    %v578 = vld [vmem:[#allocation10 + $0x3] sm:$0x1]
    %s580 = vtos %v578
    %v581 = vstv %s580
    %583 = vmatpush.bf16.xpose.msra.mxu0 %v576
    %584 = vmatpush.bf16.xpose.msra.mxu0 %v575
    %585 = vmatpush.bf16.xpose.msra.mxu0 %v574
    %586 = vmatpush.bf16.xpose.msra.mxu0 %v573
    %587 = vmatpush.bf16.xpose.msra.mxu0 %v572
    %588 = vmatpush.bf16.xpose.msra.mxu0 %v571
    %589 = vmatpush.bf16.xpose.msra.mxu0 %v570
    %590 = vmatpush.bf16.xpose.msra.mxu0 %v569
    %591 = vmatmul.bf16.gmra.mxu0 %v577
    %v592 = vpop.f32.mrf.mxu0
    %v593 = vadd.f32 %v581, %v592
    %v594 = vpop.f32.mrf.mxu0
    %595 = vdwg.mxu0
    %596 = vst [vmem:[#allocation11] sm:$0xff] %v593
    // Predicated region
    $region42: #{tpu_custom_call.1} parent=1 // pred_check
      _
    $region43: #{tpu_custom_call.1} parent=1 // pred_check_branch
      %598 = sbr.rel (0) target = $region45
    $region44: #{tpu_custom_call.1} parent=1 // pred_region
      %600 = vsyncadd [#allocation4], 0
      %s602 = sshll.u32 [#allocation11], 4
      %s603 = int_to_ptr.vmem [resolvable:$true] %s602
      %s604 = sshll.u32 %s5, 4
      %s605 = int_to_ptr.hbm [resolvable:$true] %s604
      %607 = dma.vmem_to_hbm [thread:$0]  %s603, 128, %s605, [#allocation4]
    $region45: #{tpu_custom_call.1} parent=1 // pred_fallthru
      _
    // Predicated region
    $region46: #{tpu_custom_call.1} parent=1 // pred_check
      _
    $region47: #{tpu_custom_call.1} parent=1 // pred_check_branch
      %609 = sbr.rel (0) target = $region49
    $region48: #{tpu_custom_call.1} parent=1 // pred_region
      %611 = dma.done [#allocation4], 128
    $region49: #{tpu_custom_call.1} parent=1 // pred_fallthru
      _
    %612 = vsyncpa [#allocation3], 1
    %613 = vsyncpa [#allocation6], 1
    %614 = vsyncpa [#allocation9], 1
    %615 = vsyncpa [#allocation4], 1

// kernel: tpu_custom_call.1
$region0: #{tpu_custom_call.1}
  #allocation0 [shape = 'u32[]', space=smem, size = 0x4, offset = 0x4, fixed_abs, tag = 'smem constant byte address 0x4 - core index']
  #allocation1 [shape = 'u32[72,128]{1,0:T(1,128)}', space=vmem, size = 0x9000, scoped, tag = 'internal scratch']
  %s0 = inlined_call_operand.hbm [shape: bf16[128,128], index: 0, kind: input, shape index: {}]
  %s1 = inlined_call_operand.hbm [shape: bf16[128,128], index: 1, kind: input, shape index: {}]
  %s2 = inlined_call_operand.hbm [shape: bf16[2,128,128], index: 2, kind: input, shape index: {}]
  %s3 = inlined_call_operand.hbm [shape: bf16[8,128], index: 3, kind: input, shape index: {}]
  %s4 = inlined_call_operand.hbm [shape: f32[4,128], index: 4, kind: input, shape index: {}]
  %s5 = inlined_call_operand.hbm [shape: f32[8,128], index: 5, kind: output, shape index: {}]
  %s6 = sld [smem:[#allocation0]]
  $region50: #{tpu_custom_call.1} parent=0
    _
  %s8 = ssub.s32 1, %s6
  %s9 = scalar_select 0, %s8, %s6
  $region1: #{tpu_custom_call.1} parent=0
    #allocation2 [shape = 'u8[32768]{0}', space=vmem, size = 0x8000, scoped, tag = 'input window, operand 0, single buffered']
    #allocation3 [shape = 's32[1]{0}', space=sflag, size = 0x4, scoped, tag = 'scoped memory for tpu_custom_call.1']
    #allocation4 [shape = 's32[1]{0}', space=sflag, size = 0x4, scoped, tag = 'scoped memory for tpu_custom_call.1']
    #allocation5 [shape = 'u8[32768]{0}', space=vmem, size = 0x8000, scoped, tag = 'input window, operand 1, single buffered']
    #allocation6 [shape = 's32[1]{0}', space=sflag, size = 0x4, scoped, tag = 'scoped memory for tpu_custom_call.1']
    #allocation7 [shape = 'u8[65536]{0}', space=vmem, size = 0x10000, scoped, tag = 'input window, operand 2, single buffered']
    #allocation8 [shape = 'u8[2048]{0}', space=vmem, size = 0x800, scoped, tag = 'input window, operand 3, single buffered']
    #allocation9 [shape = 's32[1]{0}', space=sflag, size = 0x4, scoped, tag = 'scoped memory for tpu_custom_call.1']
    #allocation10 [shape = 'u8[2048]{0}', space=vmem, size = 0x800, scoped, tag = 'input window, operand 4, single buffered']
    #allocation11 [shape = 'u8[4096]{0}', space=vmem, size = 0x1000, scoped, tag = 'output window, operand 0, single buffered']
    %10 = vsyncpa [#allocation3], 0
    %11 = vsyncpa [#allocation6], 0
    %12 = vsyncpa [#allocation9], 0
    %13 = vsyncpa [#allocation4], 0
    // Predicated region
    $region2: #{tpu_custom_call.1} parent=1 // pred_check
      _
    $region3: #{tpu_custom_call.1} parent=1 // pred_check_branch
      %15 = sbr.rel (0) target = $region5
    $region4: #{tpu_custom_call.1} parent=1 // pred_region
      %17 = vsyncadd [#allocation3], 0
      %s18 = sshll.u32 %s0, 4
      %s19 = int_to_ptr.hbm [resolvable:$true] %s18
      %s20 = sshll.u32 [#allocation2], 4
      %s21 = int_to_ptr.vmem [resolvable:$true] %s20
      %26 = dma.hbm_to_vmem [thread:$0]  %s19, 1024, %s21, [#allocation3], 64, 64, 4
    $region5: #{tpu_custom_call.1} parent=1 // pred_fallthru
      _
    // Predicated region
    $region6: #{tpu_custom_call.1} parent=1 // pred_check
      _
    $region7: #{tpu_custom_call.1} parent=1 // pred_check_branch
      %28 = sbr.rel (0) target = $region9
    $region8: #{tpu_custom_call.1} parent=1 // pred_region
      %30 = vsyncadd [#allocation6], 0
      %s31 = sshll.u32 %s1, 4
      %s32 = int_to_ptr.hbm [resolvable:$true] %s31
      %s33 = sshll.u32 [#allocation5], 4
      %s34 = int_to_ptr.vmem [resolvable:$true] %s33
      %39 = dma.hbm_to_vmem [thread:$0]  %s32, 1024, %s34, [#allocation6], 64, 64, 4
    $region9: #{tpu_custom_call.1} parent=1 // pred_fallthru
      _
    // Predicated region
    $region10: #{tpu_custom_call.1} parent=1 // pred_check
      _
    $region11: #{tpu_custom_call.1} parent=1 // pred_check_branch
      %41 = sbr.rel (0) target = $region13
    $region12: #{tpu_custom_call.1} parent=1 // pred_region
      %43 = vsyncadd [#allocation6], 0
      %s44 = sshll.u32 %s2, 4
      %s45 = int_to_ptr.hbm [resolvable:$true] %s44
      %s46 = sshll.u32 [#allocation7], 4
      %s47 = int_to_ptr.vmem [resolvable:$true] %s46
      %52 = dma.hbm_to_vmem [thread:$0]  %s45, 2048, %s47, [#allocation6], 64, 64, 4
    $region13: #{tpu_custom_call.1} parent=1 // pred_fallthru
      _
    // Predicated region
    $region14: #{tpu_custom_call.1} parent=1 // pred_check
      _
    $region15: #{tpu_custom_call.1} parent=1 // pred_check_branch
      %54 = sbr.rel (0) target = $region17
    $region16: #{tpu_custom_call.1} parent=1 // pred_region
      %56 = vsyncadd [#allocation9], 0
      %s58 = sshll.u32 %s3, 4
      %s59 = int_to_ptr.hbm [resolvable:$true] %s58
      %s60 = sshll.u32 [#allocation8], 4
      %s61 = int_to_ptr.vmem [resolvable:$true] %s60
      %63 = dma.hbm_to_vmem [thread:$0]  %s59, 64, %s61, [#allocation9]
    $region17: #{tpu_custom_call.1} parent=1 // pred_fallthru
      _
    // Predicated region
    $region18: #{tpu_custom_call.1} parent=1 // pred_check
      _
    $region19: #{tpu_custom_call.1} parent=1 // pred_check_branch
      %65 = sbr.rel (0) target = $region21
    $region20: #{tpu_custom_call.1} parent=1 // pred_region
      %67 = vsyncadd [#allocation9], 0
      %s69 = sshll.u32 %s4, 4
      %s70 = int_to_ptr.hbm [resolvable:$true] %s69
      %s71 = sshll.u32 [#allocation10], 4
      %s72 = int_to_ptr.vmem [resolvable:$true] %s71
      %74 = dma.hbm_to_vmem [thread:$0]  %s70, 64, %s72, [#allocation9]
    $region21: #{tpu_custom_call.1} parent=1 // pred_fallthru
      _
    // Predicated region
    $region22: #{tpu_custom_call.1} parent=1 // pred_check
      _
    $region23: #{tpu_custom_call.1} parent=1 // pred_check_branch
      %76 = sbr.rel (0) target = $region25
    $region24: #{tpu_custom_call.1} parent=1 // pred_region
      %78 = dma.done [#allocation3], 1024
    $region25: #{tpu_custom_call.1} parent=1 // pred_fallthru
      _
    // Predicated region
    $region26: #{tpu_custom_call.1} parent=1 // pred_check
      _
    $region27: #{tpu_custom_call.1} parent=1 // pred_check_branch
      %80 = sbr.rel (0) target = $region29
    $region28: #{tpu_custom_call.1} parent=1 // pred_region
      %82 = dma.done [#allocation6], 1024
    $region29: #{tpu_custom_call.1} parent=1 // pred_fallthru
      _
    // Predicated region
    $region30: #{tpu_custom_call.1} parent=1 // pred_check
      _
    $region31: #{tpu_custom_call.1} parent=1 // pred_check_branch
      %84 = sbr.rel (0) target = $region33
    $region32: #{tpu_custom_call.1} parent=1 // pred_region
      %86 = dma.done [#allocation6], 2048
    $region33: #{tpu_custom_call.1} parent=1 // pred_fallthru
      _
    // Predicated region
    $region34: #{tpu_custom_call.1} parent=1 // pred_check
      _
    $region35: #{tpu_custom_call.1} parent=1 // pred_check_branch
      %88 = sbr.rel (0) target = $region37
    $region36: #{tpu_custom_call.1} parent=1 // pred_region
      %90 = dma.done [#allocation9], 64
    $region37: #{tpu_custom_call.1} parent=1 // pred_fallthru
      _
    // Predicated region
    $region38: #{tpu_custom_call.1} parent=1 // pred_check
      _
    $region39: #{tpu_custom_call.1} parent=1 // pred_check_branch
      %92 = sbr.rel (0) target = $region41
    $region40: #{tpu_custom_call.1} parent=1 // pred_region
      %94 = dma.done [#allocation9], 64
    $region41: #{tpu_custom_call.1} parent=1 // pred_fallthru
      _
    %v95 = vld [vmem:[#allocation2] sm:$0xf]
    %v96 = vld [vmem:[#allocation2 + $0x4] sm:$0xf]
    %v97 = vld [vmem:[#allocation2 + $0x8] sm:$0xf]
    %v98 = vld [vmem:[#allocation2 + $0xc] sm:$0xf]
    %v99 = vld [vmem:[#allocation2 + $0x10] sm:$0xf]
    %v100 = vld [vmem:[#allocation2 + $0x14] sm:$0xf]
    %v101 = vld [vmem:[#allocation2 + $0x18] sm:$0xf]
    %v102 = vld [vmem:[#allocation2 + $0x1c] sm:$0xf]
    %v103 = vld [vmem:[#allocation2 + $0x20] sm:$0xf]
    %v104 = vld [vmem:[#allocation2 + $0x24] sm:$0xf]
    %v105 = vld [vmem:[#allocation2 + $0x28] sm:$0xf]
    %v106 = vld [vmem:[#allocation2 + $0x2c] sm:$0xf]
    %v107 = vld [vmem:[#allocation2 + $0x30] sm:$0xf]
    %v108 = vld [vmem:[#allocation2 + $0x34] sm:$0xf]
    %v109 = vld [vmem:[#allocation2 + $0x38] sm:$0xf]
    %v110 = vld [vmem:[#allocation2 + $0x3c] sm:$0xf]
    %v111 = vld [vmem:[#allocation5] sm:$0xf]
    %v112 = vld [vmem:[#allocation5 + $0x4] sm:$0xf]
    %v113 = vld [vmem:[#allocation5 + $0x8] sm:$0xf]
    %v114 = vld [vmem:[#allocation5 + $0xc] sm:$0xf]
    %v115 = vld [vmem:[#allocation5 + $0x10] sm:$0xf]
    %v116 = vld [vmem:[#allocation5 + $0x14] sm:$0xf]
    %v117 = vld [vmem:[#allocation5 + $0x18] sm:$0xf]
    %v118 = vld [vmem:[#allocation5 + $0x1c] sm:$0xf]
    %v119 = vld [vmem:[#allocation5 + $0x20] sm:$0xf]
    %v120 = vld [vmem:[#allocation5 + $0x24] sm:$0xf]
    %v121 = vld [vmem:[#allocation5 + $0x28] sm:$0xf]
    %v122 = vld [vmem:[#allocation5 + $0x2c] sm:$0xf]
    %v123 = vld [vmem:[#allocation5 + $0x30] sm:$0xf]
    %v124 = vld [vmem:[#allocation5 + $0x34] sm:$0xf]
    %v125 = vld [vmem:[#allocation5 + $0x38] sm:$0xf]
    %v126 = vld [vmem:[#allocation5 + $0x3c] sm:$0xf]
    %v127 = vld [vmem:[#allocation10] sm:$0x1]
    %v128 = vperm.slane %v127, 0
    %v145 = vunpack.c.l.b16 %v95
    %v146 = vunpack.c.l.b16 %v96
    %v147 = vunpack.c.l.b16 %v97
    %v148 = vunpack.c.l.b16 %v98
    %v149 = vunpack.c.l.b16 %v99
    %v150 = vunpack.c.l.b16 %v100
    %v151 = vunpack.c.l.b16 %v101
    %v152 = vunpack.c.l.b16 %v102
    %v153 = vunpack.c.l.b16 %v103
    %v154 = vunpack.c.l.b16 %v104
    %v155 = vunpack.c.l.b16 %v105
    %v156 = vunpack.c.l.b16 %v106
    %v157 = vunpack.c.l.b16 %v107
    %v158 = vunpack.c.l.b16 %v108
    %v159 = vunpack.c.l.b16 %v109
    %v160 = vunpack.c.l.b16 %v110
    %v161 = vpack.c.b16 %v146, %v145
    %v162 = vpack.c.b16 %v148, %v147
    %v163 = vpack.c.b16 %v150, %v149
    %v164 = vpack.c.b16 %v152, %v151
    %v165 = vpack.c.b16 %v154, %v153
    %v166 = vpack.c.b16 %v156, %v155
    %v167 = vpack.c.b16 %v158, %v157
    %v168 = vpack.c.b16 %v160, %v159
    %v193 = vunpack.c.l.b16 %v111
    %v194 = vunpack.c.l.b16 %v112
    %v195 = vunpack.c.l.b16 %v113
    %v196 = vunpack.c.l.b16 %v114
    %v197 = vunpack.c.l.b16 %v115
    %v198 = vunpack.c.l.b16 %v116
    %v199 = vunpack.c.l.b16 %v117
    %v200 = vunpack.c.l.b16 %v118
    %v201 = vunpack.c.l.b16 %v119
    %v202 = vunpack.c.l.b16 %v120
    %v203 = vunpack.c.l.b16 %v121
    %v204 = vunpack.c.l.b16 %v122
    %v205 = vunpack.c.l.b16 %v123
    %v206 = vunpack.c.l.b16 %v124
    %v207 = vunpack.c.l.b16 %v125
    %v208 = vunpack.c.l.b16 %v126
    %v209 = vpack.c.b16 %v194, %v193
    %v210 = vpack.c.b16 %v196, %v195
    %v211 = vpack.c.b16 %v198, %v197
    %v212 = vpack.c.b16 %v200, %v199
    %v213 = vpack.c.b16 %v202, %v201
    %v214 = vpack.c.b16 %v204, %v203
    %v215 = vpack.c.b16 %v206, %v205
    %v216 = vpack.c.b16 %v208, %v207
    %225 = vmatpush.bf16.msra.mxu0 %v216
    %226 = vmatpush.bf16.msra.mxu0 %v215
    %227 = vmatpush.bf16.msra.mxu0 %v214
    %228 = vmatpush.bf16.msra.mxu0 %v213
    %229 = vmatpush.bf16.msra.mxu0 %v212
    %230 = vmatpush.bf16.msra.mxu0 %v211
    %231 = vmatpush.bf16.msra.mxu0 %v210
    %232 = vmatpush.bf16.msra.mxu0 %v209
    %233 = vmatmul.bf16.gmra.mxu0 %v161
    %v234 = vpop.f32.mrf.mxu0
    %v235 = vadd.f32 %v128, %v234
    %v236 = vpop.f32.mrf.mxu0
    %v237 = vadd.f32 %v128, %v236
    %238 = vmatmul.bf16.gmra.mxu0 %v162
    %v239 = vpop.f32.mrf.mxu0
    %v240 = vadd.f32 %v128, %v239
    %v241 = vpop.f32.mrf.mxu0
    %v242 = vadd.f32 %v128, %v241
    %243 = vmatmul.bf16.gmra.mxu0 %v163
    %v244 = vpop.f32.mrf.mxu0
    %v245 = vadd.f32 %v128, %v244
    %v246 = vpop.f32.mrf.mxu0
    %v247 = vadd.f32 %v128, %v246
    %248 = vmatmul.bf16.gmra.mxu0 %v164
    %v249 = vpop.f32.mrf.mxu0
    %v250 = vadd.f32 %v128, %v249
    %v251 = vpop.f32.mrf.mxu0
    %v252 = vadd.f32 %v128, %v251
    %253 = vmatmul.bf16.gmra.mxu0 %v165
    %v254 = vpop.f32.mrf.mxu0
    %v255 = vadd.f32 %v128, %v254
    %v256 = vpop.f32.mrf.mxu0
    %v257 = vadd.f32 %v128, %v256
    %258 = vmatmul.bf16.gmra.mxu0 %v166
    %v259 = vpop.f32.mrf.mxu0
    %v260 = vadd.f32 %v128, %v259
    %v261 = vpop.f32.mrf.mxu0
    %v262 = vadd.f32 %v128, %v261
    %263 = vmatmul.bf16.gmra.mxu0 %v167
    %v264 = vpop.f32.mrf.mxu0
    %v265 = vadd.f32 %v128, %v264
    %v266 = vpop.f32.mrf.mxu0
    %v267 = vadd.f32 %v128, %v266
    %268 = vmatmul.bf16.gmra.mxu0 %v168
    %v269 = vpop.f32.mrf.mxu0
    %v270 = vadd.f32 %v128, %v269
    %v271 = vpop.f32.mrf.mxu0
    %v272 = vadd.f32 %v128, %v271
    %273 = vdwg.mxu0
    %v274 = vmax.f32 %v235, 0.0
    %v275 = vmax.f32 %v237, 0.0
    %v276 = vmax.f32 %v240, 0.0
    %v277 = vmax.f32 %v242, 0.0
    %v278 = vmax.f32 %v245, 0.0
    %v279 = vmax.f32 %v247, 0.0
    %v280 = vmax.f32 %v250, 0.0
    %v281 = vmax.f32 %v252, 0.0
    %v282 = vmax.f32 %v255, 0.0
    %v283 = vmax.f32 %v257, 0.0
    %v284 = vmax.f32 %v260, 0.0
    %v285 = vmax.f32 %v262, 0.0
    %v286 = vmax.f32 %v265, 0.0
    %v287 = vmax.f32 %v267, 0.0
    %v288 = vmax.f32 %v270, 0.0
    %v289 = vmax.f32 %v272, 0.0
    %v290 = vpack.c.bf16 %v275, %v274
    %v291 = vpack.c.bf16 %v277, %v276
    %v292 = vpack.c.bf16 %v279, %v278
    %v293 = vpack.c.bf16 %v281, %v280
    %v294 = vpack.c.bf16 %v283, %v282
    %v295 = vpack.c.bf16 %v285, %v284
    %v296 = vpack.c.bf16 %v287, %v286
    %v297 = vpack.c.bf16 %v289, %v288
    %v298 = vld [vmem:[#allocation7] sm:$0xf]
    %v299 = vld [vmem:[#allocation7 + $0x4] sm:$0xf]
    %v300 = vld [vmem:[#allocation7 + $0x8] sm:$0xf]
    %v301 = vld [vmem:[#allocation7 + $0xc] sm:$0xf]
    %v302 = vld [vmem:[#allocation7 + $0x10] sm:$0xf]
    %v303 = vld [vmem:[#allocation7 + $0x14] sm:$0xf]
    %v304 = vld [vmem:[#allocation7 + $0x18] sm:$0xf]
    %v305 = vld [vmem:[#allocation7 + $0x1c] sm:$0xf]
    %v306 = vld [vmem:[#allocation7 + $0x20] sm:$0xf]
    %v307 = vld [vmem:[#allocation7 + $0x24] sm:$0xf]
    %v308 = vld [vmem:[#allocation7 + $0x28] sm:$0xf]
    %v309 = vld [vmem:[#allocation7 + $0x2c] sm:$0xf]
    %v310 = vld [vmem:[#allocation7 + $0x30] sm:$0xf]
    %v311 = vld [vmem:[#allocation7 + $0x34] sm:$0xf]
    %v312 = vld [vmem:[#allocation7 + $0x38] sm:$0xf]
    %v313 = vld [vmem:[#allocation7 + $0x3c] sm:$0xf]
    %v314 = vld [vmem:[#allocation10 + $0x1] sm:$0x1]
    %v315 = vperm.slane %v314, 0
    %v332 = vunpack.c.l.b16 %v298
    %v333 = vunpack.c.l.b16 %v299
    %v334 = vunpack.c.l.b16 %v300
    %v335 = vunpack.c.l.b16 %v301
    %v336 = vunpack.c.l.b16 %v302
    %v337 = vunpack.c.l.b16 %v303
    %v338 = vunpack.c.l.b16 %v304
    %v339 = vunpack.c.l.b16 %v305
    %v340 = vunpack.c.l.b16 %v306
    %v341 = vunpack.c.l.b16 %v307
    %v342 = vunpack.c.l.b16 %v308
    %v343 = vunpack.c.l.b16 %v309
    %v344 = vunpack.c.l.b16 %v310
    %v345 = vunpack.c.l.b16 %v311
    %v346 = vunpack.c.l.b16 %v312
    %v347 = vunpack.c.l.b16 %v313
    %v348 = vpack.c.b16 %v333, %v332
    %v349 = vpack.c.b16 %v335, %v334
    %v350 = vpack.c.b16 %v337, %v336
    %v351 = vpack.c.b16 %v339, %v338
    %v352 = vpack.c.b16 %v341, %v340
    %v353 = vpack.c.b16 %v343, %v342
    %v354 = vpack.c.b16 %v345, %v344
    %v355 = vpack.c.b16 %v347, %v346
    %364 = vmatpush.bf16.msra.mxu0 %v355
    %365 = vmatpush.bf16.msra.mxu0 %v354
    %366 = vmatpush.bf16.msra.mxu0 %v353
    %367 = vmatpush.bf16.msra.mxu0 %v352
    %368 = vmatpush.bf16.msra.mxu0 %v351
    %369 = vmatpush.bf16.msra.mxu0 %v350
    %370 = vmatpush.bf16.msra.mxu0 %v349
    %371 = vmatpush.bf16.msra.mxu0 %v348
    %372 = vmatmul.bf16.gmra.mxu0 %v290
    %v373 = vpop.f32.mrf.mxu0
    %v374 = vadd.f32 %v315, %v373
    %v375 = vpop.f32.mrf.mxu0
    %v376 = vadd.f32 %v315, %v375
    %377 = vmatmul.bf16.gmra.mxu0 %v291
    %v378 = vpop.f32.mrf.mxu0
    %v379 = vadd.f32 %v315, %v378
    %v380 = vpop.f32.mrf.mxu0
    %v381 = vadd.f32 %v315, %v380
    %382 = vmatmul.bf16.gmra.mxu0 %v292
    %v383 = vpop.f32.mrf.mxu0
    %v384 = vadd.f32 %v315, %v383
    %v385 = vpop.f32.mrf.mxu0
    %v386 = vadd.f32 %v315, %v385
    %387 = vmatmul.bf16.gmra.mxu0 %v293
    %v388 = vpop.f32.mrf.mxu0
    %v389 = vadd.f32 %v315, %v388
    %v390 = vpop.f32.mrf.mxu0
    %v391 = vadd.f32 %v315, %v390
    %392 = vmatmul.bf16.gmra.mxu0 %v294
    %v393 = vpop.f32.mrf.mxu0
    %v394 = vadd.f32 %v315, %v393
    %v395 = vpop.f32.mrf.mxu0
    %v396 = vadd.f32 %v315, %v395
    %397 = vmatmul.bf16.gmra.mxu0 %v295
    %v398 = vpop.f32.mrf.mxu0
    %v399 = vadd.f32 %v315, %v398
    %v400 = vpop.f32.mrf.mxu0
    %v401 = vadd.f32 %v315, %v400
    %402 = vmatmul.bf16.gmra.mxu0 %v296
    %v403 = vpop.f32.mrf.mxu0
    %v404 = vadd.f32 %v315, %v403
    %v405 = vpop.f32.mrf.mxu0
    %v406 = vadd.f32 %v315, %v405
    %407 = vmatmul.bf16.gmra.mxu0 %v297
    %v408 = vpop.f32.mrf.mxu0
    %v409 = vadd.f32 %v315, %v408
    %v410 = vpop.f32.mrf.mxu0
    %v411 = vadd.f32 %v315, %v410
    %412 = vdwg.mxu0
    %v413 = vmax.f32 %v374, 0.0
    %v414 = vmax.f32 %v376, 0.0
    %v415 = vmax.f32 %v379, 0.0
    %v416 = vmax.f32 %v381, 0.0
    %v417 = vmax.f32 %v384, 0.0
    %v418 = vmax.f32 %v386, 0.0
    %v419 = vmax.f32 %v389, 0.0
    %v420 = vmax.f32 %v391, 0.0
    %v421 = vmax.f32 %v394, 0.0
    %v422 = vmax.f32 %v396, 0.0
    %v423 = vmax.f32 %v399, 0.0
    %v424 = vmax.f32 %v401, 0.0
    %v425 = vmax.f32 %v404, 0.0
    %v426 = vmax.f32 %v406, 0.0
    %v427 = vmax.f32 %v409, 0.0
    %v428 = vmax.f32 %v411, 0.0
    %v429 = vpack.c.bf16 %v414, %v413
    %v430 = vpack.c.bf16 %v416, %v415
    %v431 = vpack.c.bf16 %v418, %v417
    %v432 = vpack.c.bf16 %v420, %v419
    %v433 = vpack.c.bf16 %v422, %v421
    %v434 = vpack.c.bf16 %v424, %v423
    %v435 = vpack.c.bf16 %v426, %v425
    %v436 = vpack.c.bf16 %v428, %v427
    %s437 = scalar_lea.vmem [#allocation7], 64
    %v438 = vld [vmem:[%s437] sm:$0xf]
    %v439 = vld [vmem:[%s437 + $0x4] sm:$0xf]
    %v440 = vld [vmem:[%s437 + $0x8] sm:$0xf]
    %v441 = vld [vmem:[%s437 + $0xc] sm:$0xf]
    %v442 = vld [vmem:[%s437 + $0x10] sm:$0xf]
    %v443 = vld [vmem:[%s437 + $0x14] sm:$0xf]
    %v444 = vld [vmem:[%s437 + $0x18] sm:$0xf]
    %v445 = vld [vmem:[%s437 + $0x1c] sm:$0xf]
    %v446 = vld [vmem:[%s437 + $0x20] sm:$0xf]
    %v447 = vld [vmem:[%s437 + $0x24] sm:$0xf]
    %v448 = vld [vmem:[%s437 + $0x28] sm:$0xf]
    %v449 = vld [vmem:[%s437 + $0x2c] sm:$0xf]
    %v450 = vld [vmem:[%s437 + $0x30] sm:$0xf]
    %v451 = vld [vmem:[%s437 + $0x34] sm:$0xf]
    %v452 = vld [vmem:[%s437 + $0x38] sm:$0xf]
    %v453 = vld [vmem:[%s437 + $0x3c] sm:$0xf]
    %v454 = vld [vmem:[#allocation10 + $0x2] sm:$0x1]
    %v455 = vperm.slane %v454, 0
    %v472 = vunpack.c.l.b16 %v438
    %v473 = vunpack.c.l.b16 %v439
    %v474 = vunpack.c.l.b16 %v440
    %v475 = vunpack.c.l.b16 %v441
    %v476 = vunpack.c.l.b16 %v442
    %v477 = vunpack.c.l.b16 %v443
    %v478 = vunpack.c.l.b16 %v444
    %v479 = vunpack.c.l.b16 %v445
    %v480 = vunpack.c.l.b16 %v446
    %v481 = vunpack.c.l.b16 %v447
    %v482 = vunpack.c.l.b16 %v448
    %v483 = vunpack.c.l.b16 %v449
    %v484 = vunpack.c.l.b16 %v450
    %v485 = vunpack.c.l.b16 %v451
    %v486 = vunpack.c.l.b16 %v452
    %v487 = vunpack.c.l.b16 %v453
    %v488 = vpack.c.b16 %v473, %v472
    %v489 = vpack.c.b16 %v475, %v474
    %v490 = vpack.c.b16 %v477, %v476
    %v491 = vpack.c.b16 %v479, %v478
    %v492 = vpack.c.b16 %v481, %v480
    %v493 = vpack.c.b16 %v483, %v482
    %v494 = vpack.c.b16 %v485, %v484
    %v495 = vpack.c.b16 %v487, %v486
    %504 = vmatpush.bf16.msra.mxu0 %v495
    %505 = vmatpush.bf16.msra.mxu0 %v494
    %506 = vmatpush.bf16.msra.mxu0 %v493
    %507 = vmatpush.bf16.msra.mxu0 %v492
    %508 = vmatpush.bf16.msra.mxu0 %v491
    %509 = vmatpush.bf16.msra.mxu0 %v490
    %510 = vmatpush.bf16.msra.mxu0 %v489
    %511 = vmatpush.bf16.msra.mxu0 %v488
    %512 = vmatmul.bf16.gmra.mxu0 %v429
    %v513 = vpop.f32.mrf.mxu0
    %v514 = vadd.f32 %v455, %v513
    %v515 = vpop.f32.mrf.mxu0
    %v516 = vadd.f32 %v455, %v515
    %517 = vmatmul.bf16.gmra.mxu0 %v430
    %v518 = vpop.f32.mrf.mxu0
    %v519 = vadd.f32 %v455, %v518
    %v520 = vpop.f32.mrf.mxu0
    %v521 = vadd.f32 %v455, %v520
    %522 = vmatmul.bf16.gmra.mxu0 %v431
    %v523 = vpop.f32.mrf.mxu0
    %v524 = vadd.f32 %v455, %v523
    %v525 = vpop.f32.mrf.mxu0
    %v526 = vadd.f32 %v455, %v525
    %527 = vmatmul.bf16.gmra.mxu0 %v432
    %v528 = vpop.f32.mrf.mxu0
    %v529 = vadd.f32 %v455, %v528
    %v530 = vpop.f32.mrf.mxu0
    %v531 = vadd.f32 %v455, %v530
    %532 = vmatmul.bf16.gmra.mxu0 %v433
    %v533 = vpop.f32.mrf.mxu0
    %v534 = vadd.f32 %v455, %v533
    %v535 = vpop.f32.mrf.mxu0
    %v536 = vadd.f32 %v455, %v535
    %537 = vmatmul.bf16.gmra.mxu0 %v434
    %v538 = vpop.f32.mrf.mxu0
    %v539 = vadd.f32 %v455, %v538
    %v540 = vpop.f32.mrf.mxu0
    %v541 = vadd.f32 %v455, %v540
    %542 = vmatmul.bf16.gmra.mxu0 %v435
    %v543 = vpop.f32.mrf.mxu0
    %v544 = vadd.f32 %v455, %v543
    %v545 = vpop.f32.mrf.mxu0
    %v546 = vadd.f32 %v455, %v545
    %547 = vmatmul.bf16.gmra.mxu0 %v436
    %v548 = vpop.f32.mrf.mxu0
    %v549 = vadd.f32 %v455, %v548
    %v550 = vpop.f32.mrf.mxu0
    %v551 = vadd.f32 %v455, %v550
    %552 = vdwg.mxu0
    %v553 = vmax.f32 %v514, 0.0
    %v554 = vmax.f32 %v516, 0.0
    %v555 = vmax.f32 %v519, 0.0
    %v556 = vmax.f32 %v521, 0.0
    %v557 = vmax.f32 %v524, 0.0
    %v558 = vmax.f32 %v526, 0.0
    %v559 = vmax.f32 %v529, 0.0
    %v560 = vmax.f32 %v531, 0.0
    %v561 = vmax.f32 %v534, 0.0
    %v562 = vmax.f32 %v536, 0.0
    %v563 = vmax.f32 %v539, 0.0
    %v564 = vmax.f32 %v541, 0.0
    %v565 = vmax.f32 %v544, 0.0
    %v566 = vmax.f32 %v546, 0.0
    %v567 = vmax.f32 %v549, 0.0
    %v568 = vmax.f32 %v551, 0.0
    %v569 = vpack.c.bf16 %v554, %v553
    %v570 = vpack.c.bf16 %v556, %v555
    %v571 = vpack.c.bf16 %v558, %v557
    %v572 = vpack.c.bf16 %v560, %v559
    %v573 = vpack.c.bf16 %v562, %v561
    %v574 = vpack.c.bf16 %v564, %v563
    %v575 = vpack.c.bf16 %v566, %v565
    %v576 = vpack.c.bf16 %v568, %v567
    %v577 = vld [vmem:[#allocation8] sm:$0xf]
    %v578 = vld [vmem:[#allocation10 + $0x3] sm:$0x1]
    %s580 = vtos %v578
    %v581 = vstv %s580
    %583 = vmatpush.bf16.xpose.msra.mxu0 %v576
    %584 = vmatpush.bf16.xpose.msra.mxu0 %v575
    %585 = vmatpush.bf16.xpose.msra.mxu0 %v574
    %586 = vmatpush.bf16.xpose.msra.mxu0 %v573
    %587 = vmatpush.bf16.xpose.msra.mxu0 %v572
    %588 = vmatpush.bf16.xpose.msra.mxu0 %v571
    %589 = vmatpush.bf16.xpose.msra.mxu0 %v570
    %590 = vmatpush.bf16.xpose.msra.mxu0 %v569
    %591 = vmatmul.bf16.gmra.mxu0 %v577
    %v592 = vpop.f32.mrf.mxu0
    %v593 = vadd.f32 %v581, %v592
    %v594 = vpop.f32.mrf.mxu0
    %595 = vdwg.mxu0
    %596 = vst [vmem:[#allocation11] sm:$0xff] %v593
    // Predicated region
    $region42: #{tpu_custom_call.1} parent=1 // pred_check
      _
    $region43: #{tpu_custom_call.1} parent=1 // pred_check_branch
      %598 = sbr.rel (0) target = $region45
    $region44: #{tpu_custom_call.1} parent=1 // pred_region
      %600 = vsyncadd [#allocation4], 0
      %s602 = sshll.u32 [#allocation11], 4
      %s603 = int_to_ptr.vmem [resolvable:$true] %s602
      %s604 = sshll.u32 %s5, 4
      %s605 = int_to_ptr.hbm [resolvable:$true] %s604
      %607 = dma.vmem_to_hbm [thread:$0]  %s603, 128, %s605, [#allocation4]
    $region45: #{tpu_custom_call.1} parent=1 // pred_fallthru
      _
    // Predicated region
    $region46: #{tpu_custom_call.1} parent=1 // pred_check
      _
    $region47: #{tpu_custom_call.1} parent=1 // pred_check_branch
      %609 = sbr.rel (0) target = $region49
    $region48: #{tpu_custom_call.1} parent=1 // pred_region
      %611 = dma.done [#allocation4], 128
    $region49: #{tpu_custom_call.1} parent=1 // pred_fallthru
      _
    %612 = vsyncpa [#allocation3], 1
    %613 = vsyncpa [#allocation6], 1
    %614 = vsyncpa [#allocation9], 1
    %615 = vsyncpa [#allocation4], 1

</llo_original>
